<compile_context>
chip_gen: v6e
topology: v6e:2x2x1
jax: 0.10.0
libtpu: 0.0.40
codegen_flags: <defaults>
</compile_context>

<pallas_src>
import functools

import jax
import jax.numpy as jnp
from jax import lax
from jax.experimental import pallas as pl
from jax.experimental.pallas import tpu as pltpu


def _self_attention_kernel(x_ref, w_ref, b_ref, o_ref, *, batch_tile, seq_len):
    # x_ref: (bt*S, D) f32 row-slab covering `batch_tile` full sequences.
    # w_ref: (D, D)    bf16 PyTorch Linear weight, laid out (out, in), pre-cast.
    # b_ref: (1, D)    f32 bias.
    x = x_ref[...]                                            # (bt*S, D) f32

    # bf16 MXU matmul with f32 accumulation. Contract x's feature dim with
    # W's input dim (dim 1 of the (out, in) weight) => x @ W.T.
    u = lax.dot_general(
        x.astype(jnp.bfloat16),
        w_ref[...],
        dimension_numbers=(((1,), (1,)), ((), ())),
        preferred_element_type=jnp.float32,
    )
    u = jnp.tanh(u + b_ref[...])                              # (bt*S, D) f32 (EUP tanh)

    # Segmented softmax over the sequence axis (per batch element), max-subtracted.
    d = u.shape[-1]
    u3 = u.reshape(batch_tile, seq_len, d)                    # (bt, S, D)
    m = jnp.max(u3, axis=1, keepdims=True)                    # (bt, 1, D)
    e = jnp.exp(u3 - m)                                       # (bt, S, D) (EUP exp)
    denom = jnp.sum(e, axis=1, keepdims=True)                 # (bt, 1, D)
    a = e * pl.reciprocal(denom, approx=True)                 # EUP vrcp

    # Gate the original (f32) input.
    o_ref[...] = (a.reshape(x.shape) * x).astype(o_ref.dtype)


def _pick_batch_tile(B, S, target_rows=512):
    """Choose how many batch elements to fold into one grid step."""
    bt = max(1, min(B, target_rows // max(S, 1)))
    while B % bt:                       # must evenly tile the batch
        bt -= 1
    # v7x has 2 TensorCores: prefer >=2 "parallel" grid steps, but only when
    # each step still gets a reasonably large row tile.
    if B // bt < 2 and B >= 2 and (bt // 2) * S >= 128:
        bt = max(1, bt // 2)
        while B % bt:
            bt -= 1
    # (8, 128) rule: block rows must be a multiple of 8 unless equal to B*S.
    if (bt * S) % 8 != 0 and bt != B:
        bt = B
    return bt


def self_attention(x, w, b, *, target_rows=512):
    """x: (B, S, D) f32; w: (D, D) PyTorch Linear weight (out, in); b: (D,)."""
    B, S, D = x.shape
    bt = _pick_batch_tile(B, S, target_rows)
    grid = (B // bt,)

    x2d = x.reshape(B * S, D)            # free bitcast; rows grouped by batch
    w_bf16 = w.astype(jnp.bfloat16)      # one-time cast, outside the grid loop
    b2d = b.reshape(1, D)

    kernel = functools.partial(_self_attention_kernel, batch_tile=bt, seq_len=S)

    out2d = pl.pallas_call(
        kernel,
        out_shape=jax.ShapeDtypeStruct((B * S, D), x.dtype),
        grid_spec=pltpu.PrefetchScalarGridSpec(
            num_scalar_prefetch=0,
            grid=grid,
            in_specs=[
                pl.BlockSpec((bt * S, D), lambda i: (i, 0)),   # x row-slab
                pl.BlockSpec((D, D), lambda i: (0, 0)),        # weight (VMEM-resident)
                pl.BlockSpec((1, D), lambda i: (0, 0)),        # bias (VMEM-resident)
            ],
            out_specs=pl.BlockSpec((bt * S, D), lambda i: (i, 0)),
        ),
        compiler_params=pltpu.CompilerParams(
            dimension_semantics=("parallel",),
        ),
    )(x2d, w_bf16, b2d)
    return out2d.reshape(B, S, D)


def self_attention_ref(x, w, b):
    # Pure-JAX (f32) reference mirroring the PyTorch module.
    u = jnp.tanh(jnp.einsum("bsd,od->bso", x, w) + b)
    a = jax.nn.softmax(u, axis=1)
    return a * x


if __name__ == "__main__":
    B, S, D = 2, 8, 32
    key = jax.random.PRNGKey(0)
    kx, kw, kb = jax.random.split(key, 3)

    x = jax.random.normal(kx, (B, S, D), dtype=jnp.float32)
    # PyTorch Linear(input_size, input_size) params, weight shape (out, in) = (D, D).
    w = jax.random.normal(kw, (D, D), dtype=jnp.float32) * 0.1
    b = jax.random.normal(kb, (D,), dtype=jnp.float32) * 0.1

    out = jax.block_until_ready(self_attention(x, w, b))
    ref = self_attention_ref(x, w, b)

    assert out.shape == (B, S, D)
    assert bool(jnp.all(jnp.isfinite(out)))
    # bf16 MXU inputs + approx reciprocal => looser tolerance than a pure-f32 check.
    assert jnp.allclose(out, ref, atol=3e-2, rtol=3e-2), "mismatch vs reference"

    print("KERNEL_OK")
</pallas_src>

<mosaic_0001>
module attributes {stable_mosaic.version = 11 : i64} {
  func.func @_self_attention_kernel(%arg0: i32, %arg1: memref<16x32xf32, #tpu.memory_space<vmem>>, %arg2: memref<32x32xbf16, #tpu.memory_space<vmem>>, %arg3: memref<1x32xf32, #tpu.memory_space<vmem>>, %arg4: memref<16x32xf32, #tpu.memory_space<vmem>>) attributes {dimension_semantics = [#tpu.dimension_semantics<parallel>], iteration_bounds = array<i64: 1>, scalar_prefetch = 0 : i64, scratch_operands = 0 : i64, tpu.core_type = #tpu.core_type<tc>, window_params = [{transform_indices = @transform_0, window_bounds = array<i64: 16, 32>}, {pipeline_mode = #tpu.pipeline_mode<synchronous>, transform_indices = @transform_1, window_bounds = array<i64: 32, 32>}, {pipeline_mode = #tpu.pipeline_mode<synchronous>, transform_indices = @transform_2, window_bounds = array<i64: 1, 32>}, {transform_indices = @transform_3, window_bounds = array<i64: 16, 32>}]} {
    %c0 = arith.constant 0 : index
    %c0_0 = arith.constant 0 : index
    %0 = vector.load %arg1[%c0, %c0_0] : memref<16x32xf32, #tpu.memory_space<vmem>>, vector<16x32xf32>
    %1 = arith.truncf %0 : vector<16x32xf32> to vector<16x32xbf16>
    %c0_1 = arith.constant 0 : index
    %c0_2 = arith.constant 0 : index
    %2 = vector.load %arg2[%c0_1, %c0_2] : memref<32x32xbf16, #tpu.memory_space<vmem>>, vector<32x32xbf16>
    %cst = arith.constant dense<0.000000e+00> : vector<16x32xf32>
    %3 = tpu.matmul %1, %2, %cst {dimension_numbers = #tpu.dot_dimension_numbers<[1], [1], [0], [0], [0, 0, 1, 0], [], []>} : vector<16x32xbf16>, vector<32x32xbf16>, vector<16x32xf32> -> vector<16x32xf32>
    %c0_3 = arith.constant 0 : index
    %c0_4 = arith.constant 0 : index
    %4 = vector.load %arg3[%c0_3, %c0_4] : memref<1x32xf32, #tpu.memory_space<vmem>>, vector<1x32xf32>
    %5 = vector.broadcast %4 : vector<1x32xf32> to vector<16x32xf32>
    %6 = arith.addf %3, %5 : vector<16x32xf32>
    %7 = math.tanh %6 : vector<16x32xf32>
    %8 = vector.shape_cast %7 : vector<16x32xf32> to vector<2x8x32xf32>
    %cst_5 = arith.constant dense<0xFF800000> : vector<2x32xf32>
    %9 = vector.multi_reduction <maximumf>, %8, %cst_5 [1] : vector<2x8x32xf32> to vector<2x32xf32>
    %10 = vector.shape_cast %9 : vector<2x32xf32> to vector<2x1x32xf32>
    %11 = vector.broadcast %10 : vector<2x1x32xf32> to vector<2x8x32xf32>
    %12 = arith.subf %8, %11 : vector<2x8x32xf32>
    %13 = math.exp %12 : vector<2x8x32xf32>
    %cst_6 = arith.constant dense<0.000000e+00> : vector<2x32xf32>
    %14 = vector.multi_reduction <add>, %13, %cst_6 [1] : vector<2x8x32xf32> to vector<2x32xf32>
    %15 = vector.shape_cast %14 : vector<2x32xf32> to vector<2x1x32xf32>
    %16 = tpu.reciprocal %15 {approx = true} : vector<2x1x32xf32> -> vector<2x1x32xf32>
    %17 = vector.broadcast %16 : vector<2x1x32xf32> to vector<2x8x32xf32>
    %18 = arith.mulf %13, %17 : vector<2x8x32xf32>
    %19 = vector.shape_cast %18 : vector<2x8x32xf32> to vector<16x32xf32>
    %20 = arith.mulf %19, %0 : vector<16x32xf32>
    %c0_7 = arith.constant 0 : index
    %c0_8 = arith.constant 0 : index
    %21 = vector.load %arg4[%c0_7, %c0_8] : memref<16x32xf32, #tpu.memory_space<vmem>>, vector<16x32xf32>
    tpu.vector_store %arg4[%c0_7, %c0_8], %20 {strides = array<i32>} : memref<16x32xf32, #tpu.memory_space<vmem>>, vector<16x32xf32>,
    return
  }
  func.func @transform_0(%arg0: i32) -> (i32, i32) {
    %c0_i32 = arith.constant 0 : i32
    %c0_i32_0 = arith.constant 0 : i32
    return %arg0, %c0_i32 : i32, i32
  }
  func.func @transform_1(%arg0: i32) -> (i32, i32) {
    %c0_i32 = arith.constant 0 : i32
    %c0_i32_0 = arith.constant 0 : i32
    %c0_i32_1 = arith.constant 0 : i32
    return %c0_i32, %c0_i32_0 : i32, i32
  }
  func.func @transform_2(%arg0: i32) -> (i32, i32) {
    %c0_i32 = arith.constant 0 : i32
    %c0_i32_0 = arith.constant 0 : i32
    %c0_i32_1 = arith.constant 0 : i32
    return %c0_i32, %c0_i32_0 : i32, i32
  }
  func.func @transform_3(%arg0: i32) -> (i32, i32) {
    %c0_i32 = arith.constant 0 : i32
    %c0_i32_0 = arith.constant 0 : i32
    return %arg0, %c0_i32 : i32, i32
  }
}

</mosaic_0001>

<llo_original>
// kernel: tpu_custom_call.1
$region0: #{tpu_custom_call.1}
  #allocation0 [shape = 'u32[]', space=smem, size = 0x4, offset = 0x4, fixed_abs, tag = 'smem constant byte address 0x4 - core index']
  #allocation1 [shape = 'u32[144,128]{1,0:T(1,128)}', space=vmem, size = 0x12000, scoped, tag = 'internal scratch']
  %s0 = inlined_call_operand.hbm [shape: f32[16,32], index: 0, kind: input, shape index: {}]
  %s1 = inlined_call_operand.hbm [shape: bf16[32,32], index: 1, kind: input, shape index: {}]
  %s2 = inlined_call_operand.vmem [shape: f32[1,32], index: 2, kind: input, shape index: {}]
  %s3 = inlined_call_operand.hbm [shape: f32[16,32], index: 3, kind: output, shape index: {}]
  %s4 = sld [smem:[#allocation0]]
  $region30: #{tpu_custom_call.1} parent=0
    _
  %s6 = ssub.s32 1, %s4
  %s7 = scalar_select 0, %s6, %s4
  $region1: #{tpu_custom_call.1} parent=0
    #allocation2 [shape = 'u8[8192]{0}', space=vmem, size = 0x2000, scoped, tag = 'input window, operand 0, single buffered']
    #allocation3 [shape = 's32[1]{0}', space=sflag, size = 0x4, scoped, tag = 'scoped memory for tpu_custom_call.1']
    #allocation4 [shape = 's32[1]{0}', space=sflag, size = 0x4, scoped, tag = 'scoped memory for tpu_custom_call.1']
    #allocation5 [shape = 'u8[8192]{0}', space=vmem, size = 0x2000, scoped, tag = 'input window, operand 1, single buffered']
    #allocation6 [shape = 's32[1]{0}', space=sflag, size = 0x4, scoped, tag = 'scoped memory for tpu_custom_call.1']
    #allocation7 [shape = 'u8[8192]{0}', space=vmem, size = 0x2000, scoped, tag = 'output window, operand 0, single buffered']
    %8 = vsyncpa [#allocation3], 0
    %9 = vsyncpa [#allocation6], 0
    %10 = vsyncpa [#allocation4], 0
    // Predicated region
    $region2: #{tpu_custom_call.1} parent=1 // pred_check
      _
    $region3: #{tpu_custom_call.1} parent=1 // pred_check_branch
      %12 = sbr.rel (0) target = $region5
    $region4: #{tpu_custom_call.1} parent=1 // pred_region
      %s14 = ssub.s32 256, 256
      %15 = vsyncadd [#allocation3], %s14
      %s16 = sshll.u32 [#allocation2], 4
      %s17 = int_to_ptr.vmem [resolvable:$true] %s16
      %22 = dma.hbm_to_vmem [thread:$0]  %s0, 256, %s17, [#allocation3], 128, 128, 8
    $region5: #{tpu_custom_call.1} parent=1 // pred_fallthru
      _
    // Predicated region
    $region6: #{tpu_custom_call.1} parent=1 // pred_check
      _
    $region7: #{tpu_custom_call.1} parent=1 // pred_check_branch
      %24 = sbr.rel (0) target = $region9
    $region8: #{tpu_custom_call.1} parent=1 // pred_region
      %s26 = ssub.s32 256, 256
      %27 = vsyncadd [#allocation6], %s26
      %s28 = sshll.u32 [#allocation5], 4
      %s29 = int_to_ptr.vmem [resolvable:$true] %s28
      %34 = dma.hbm_to_vmem [thread:$0]  %s1, 256, %s29, [#allocation6], 64, 64, 4
    $region9: #{tpu_custom_call.1} parent=1 // pred_fallthru
      _
    // Predicated region
    $region10: #{tpu_custom_call.1} parent=1 // pred_check
      _
    $region11: #{tpu_custom_call.1} parent=1 // pred_check_branch
      %36 = sbr.rel (0) target = $region13
    $region12: #{tpu_custom_call.1} parent=1 // pred_region
      _
    $region13: #{tpu_custom_call.1} parent=1 // pred_fallthru
      _
    // Predicated region
    $region14: #{tpu_custom_call.1} parent=1 // pred_check
      _
    $region15: #{tpu_custom_call.1} parent=1 // pred_check_branch
      %38 = sbr.rel (0) target = $region17
    $region16: #{tpu_custom_call.1} parent=1 // pred_region
      %39 = dma.done [#allocation3], 256
    $region17: #{tpu_custom_call.1} parent=1 // pred_fallthru
      _
    // Predicated region
    $region18: #{tpu_custom_call.1} parent=1 // pred_check
      _
    $region19: #{tpu_custom_call.1} parent=1 // pred_check_branch
      %41 = sbr.rel (0) target = $region21
    $region20: #{tpu_custom_call.1} parent=1 // pred_region
      %42 = dma.done [#allocation6], 256
    $region21: #{tpu_custom_call.1} parent=1 // pred_fallthru
      _
    %v44 = vld [vmem:[#allocation2] sm:$0xff]
    %v45 = vld [vmem:[#allocation2 + $0x8] sm:$0xff]
    %v46 = vpack.c.bf16 %v45, %v44
    %v47 = vld [vmem:[#allocation5] sm:$0xf]
    %v48 = vld [vmem:[#allocation5 + $0x4] sm:$0xf]
    %v49 = vld [vmem:[#allocation5 + $0x8] sm:$0xf]
    %v50 = vld [vmem:[#allocation5 + $0xc] sm:$0xf]
    %v51 = vld [vmem:[%s2] sm:$0x1]
    %v53 = vlaneseq
    %v54 = vshrl.u32 %v53, 7
    %v55 = vsub.s32 0, %v54
    %v56 = vrot.slane %v51, %v55
    %v62 = vunpack.c.l.b16 %v47
    %v63 = vunpack.c.l.b16 %v48
    %v64 = vunpack.c.l.b16 %v49
    %v65 = vunpack.c.l.b16 %v50
    %v66 = vpack.c.b16 %v63, %v62
    %v67 = vpack.c.b16 %v65, %v64
    %vm68 = vcmask 261120
    %v70 = vsel %vm68, %v46, 0
    %v73 = vsel %vm68, %v66, 0
    %v76 = vsel %vm68, %v67, 0
    %78 = vmatprep.subr.bf16.mxu0 0
    %79 = vmatpush1.bf16.xpose.msra.mxu0 0
    %80 = vmatprep.subr.bf16.mxu0 0
    %81 = vmatpush1.bf16.xpose.msra.mxu0 0
    %82 = vmatprep.subr.bf16.mxu0 0
    %83 = vmatpush1.bf16.xpose.msra.mxu0 0
    %84 = vmatprep.subr.bf16.mxu0 0
    %85 = vmatpush1.bf16.xpose.msra.mxu0 0
    %86 = vmatprep.subr.bf16.mxu0 0
    %87 = vmatpush1.bf16.xpose.msra.mxu0 0
    %88 = vmatprep.subr.bf16.mxu0 0
    %89 = vmatpush1.bf16.xpose.msra.mxu0 0
    %90 = vmatprep.subr.bf16.mxu0 0
    %91 = vmatpush1.bf16.xpose.msra.mxu0 %v76
    %92 = vmatprep.subr.bf16.mxu0 0
    %93 = vmatpush1.bf16.xpose.msra.mxu0 %v73
    %94 = vmatprep.subr.bf16.mxu0 0
    %95 = vmatpush2.bf16.xpose.msra.mxu0 0
    %96 = vmatprep.subr.bf16.mxu0 0
    %97 = vmatpush2.bf16.xpose.msra.mxu0 0
    %98 = vmatprep.subr.bf16.mxu0 0
    %99 = vmatpush2.bf16.xpose.msra.mxu0 0
    %100 = vmatprep.subr.bf16.mxu0 0
    %101 = vmatpush2.bf16.xpose.msra.mxu0 0
    %102 = vmatprep.subr.bf16.mxu0 0
    %103 = vmatpush2.bf16.xpose.msra.mxu0 0
    %104 = vmatprep.subr.bf16.mxu0 0
    %105 = vmatpush2.bf16.xpose.msra.mxu0 0
    %106 = vmatprep.subr.bf16.mxu0 0
    %107 = vmatpush2.bf16.xpose.msra.mxu0 0
    %108 = vmatprep.subr.bf16.mxu0 0
    %109 = vmatpush2.bf16.xpose.msra.mxu0 0
    %110 = vmatprep.mubr.bf16.mxu0 0
    %111 = vmatmul.mubr.bf16.gmra.mxu0 %v70
    %v112 = vpop.f32.mrf.mxu0
    %v113 = vadd.f32 %v56, %v112
    %v114 = vpop.f32.mrf.mxu0
    %v115 = vpop.f32.mrf.mxu0
    %v116 = vadd.f32 %v56, %v115
    %v117 = vpop.f32.mrf.mxu0
    %118 = vdwg.mxu0
    %v119 = vtanh.pop %v113
    %v120 = vtanh.pop %v116
    %v121 = vsel %vm68, %v119, -inf
    %v122 = vrot.slane %v121, 4
    %v123 = vmax.f32 %v121, %v122
    %v124 = vrot.slane %v123, 2
    %v125 = vmax.f32 %v123, %v124
    %v126 = vrot.slane %v125, 1
    %v127 = vmax.f32 %v125, %v126
    %v128 = vsel %vm68, %v120, -inf
    %v129 = vrot.slane %v128, 4
    %v130 = vmax.f32 %v128, %v129
    %v131 = vrot.slane %v130, 2
    %v132 = vmax.f32 %v130, %v131
    %v133 = vrot.slane %v132, 1
    %v134 = vmax.f32 %v132, %v133
    %v135 = vsub.f32 %v119, %v127
    %v136 = vsub.f32 %v120, %v134
    %v137 = vmul.f32 %v135, 1.442695
    %v138 = vpow.pop %v137
    %v139 = vmul.f32 %v136, 1.442695
    %v140 = vpow.pop %v139
    %v141 = vsel %vm68, %v138, 0.0
    %v142 = vrot.slane %v141, 4
    %v143 = vadd.f32 %v141, %v142
    %v144 = vrot.slane %v143, 2
    %v145 = vadd.f32 %v143, %v144
    %v146 = vrot.slane %v145, 1
    %v147 = vadd.f32 %v145, %v146
    %v148 = vsel %vm68, %v140, 0.0
    %v149 = vrot.slane %v148, 4
    %v150 = vadd.f32 %v148, %v149
    %v151 = vrot.slane %v150, 2
    %v152 = vadd.f32 %v150, %v151
    %v153 = vrot.slane %v152, 1
    %v154 = vadd.f32 %v152, %v153
    %v155 = vrcp.pop %v147
    %v156 = vrcp.pop %v154
    %v157 = vmul.f32 %v138, %v155
    %v158 = vmul.f32 %v140, %v156
    %v159 = vmul.f32 %v157, %v44
    %v160 = vmul.f32 %v158, %v45
    %161 = vst.msk [vmem:[#allocation7] sm:$0xff] %vm68, %v159
    %162 = vst.msk [vmem:[#allocation7 + $0x8] sm:$0xff] %vm68, %v160
    // Predicated region
    $region22: #{tpu_custom_call.1} parent=1 // pred_check
      _
    $region23: #{tpu_custom_call.1} parent=1 // pred_check_branch
      %164 = sbr.rel (0) target = $region25
    $region24: #{tpu_custom_call.1} parent=1 // pred_region
      %s166 = ssub.s32 256, 256
      %167 = vsyncadd [#allocation4], %s166
      %s168 = sshll.u32 [#allocation7], 4
      %s169 = int_to_ptr.vmem [resolvable:$true] %s168
      %174 = dma.vmem_to_hbm [thread:$0]  %s169, 256, %s3, [#allocation4], 128, 128, 8
    $region25: #{tpu_custom_call.1} parent=1 // pred_fallthru
      _
    // Predicated region
    $region26: #{tpu_custom_call.1} parent=1 // pred_check
      _
    $region27: #{tpu_custom_call.1} parent=1 // pred_check_branch
      %176 = sbr.rel (0) target = $region29
    $region28: #{tpu_custom_call.1} parent=1 // pred_region
      %177 = dma.done [#allocation4], 256
    $region29: #{tpu_custom_call.1} parent=1 // pred_fallthru
      _
    %178 = vsyncpa [#allocation3], 1
    %179 = vsyncpa [#allocation6], 1
    %180 = vsyncpa [#allocation4], 1

</llo_original>
